<compile_context>
chip_gen: v7x
topology: tpu7x:2x2x1
jax: 0.10.0
libtpu: 0.0.40
codegen_flags: <defaults>
</compile_context>

<pallas_src>
import functools

import jax
import jax.numpy as jnp
from jax.experimental import pallas as pl
from jax.experimental.pallas import tpu as pltpu

_LANE = 128      # vreg lane width (last dim)
_SUBLANE = 8     # vreg sublane width (second-to-last dim, f32)


def _round_up(n, m):
    return ((n + m - 1) // m) * m


def _fused_mlp_kernel(*refs, n_layers):
    """refs = (x_ref, w0, b0, w1, b1, ..., w_{L-1}, b_{L-1}, o_ref); all VMEM.

    Statically unrolled over layers: MXU matmul (f32 accumulate) + VPU bias/ReLU,
    intermediates stay in VMEM/vregs, only the final result is stored.
    """
    x_ref = refs[0]
    o_ref = refs[-1]
    h = x_ref[...]
    for i in range(n_layers):
        w = refs[1 + 2 * i][...]
        b = refs[2 + 2 * i][...]                  # (1, OUT_pad) -> broadcast over batch
        h = jnp.dot(h, w, preferred_element_type=jnp.float32) + b
        if i < n_layers - 1:                      # hidden layers: ReLU (dropout = identity in eval)
            h = jnp.maximum(h, 0.0)
    o_ref[...] = h.astype(o_ref.dtype)


def complex_mlp_forward(x, params):
    """Fused forward pass: hidden layers = Linear -> ReLU -> Dropout(eval=identity); output = Linear.

    x: (B, IN) float32; params: list of (w: (in, out), b: (1, out)) float32.
    Feature dims are zero-padded to multiples of 128 (lane-dense) and batch to a
    multiple of 8; padding columns stay exactly zero through every layer
    (zero weight rows/cols + zero bias + ReLU(0)=0), so results are unchanged.
    """
    B, IN = x.shape
    OUT = params[-1][0].shape[1]
    n_layers = len(params)

    Bp = _round_up(B, _SUBLANE)
    dims = [IN] + [w.shape[1] for (w, _) in params]
    dims_p = [_round_up(d, _LANE) for d in dims]

    x_p = jnp.zeros((Bp, dims_p[0]), jnp.float32).at[:B, :IN].set(x)

    flat_inputs = [x_p]
    for i, (w, b) in enumerate(params):
        in_p, out_p = dims_p[i], dims_p[i + 1]
        w_p = jnp.zeros((in_p, out_p), jnp.float32).at[: w.shape[0], : w.shape[1]].set(w)
        b_p = jnp.zeros((1, out_p), jnp.float32).at[:, : b.shape[1]].set(b)
        flat_inputs += [w_p, b_p]

    kernel = functools.partial(_fused_mlp_kernel, n_layers=n_layers)
    out_padded = pl.pallas_call(
        kernel,
        out_shape=jax.ShapeDtypeStruct((Bp, dims_p[-1]), jnp.float32),
        in_specs=[pl.BlockSpec(memory_space=pltpu.MemorySpace.VMEM)] * len(flat_inputs),
        out_specs=pl.BlockSpec(memory_space=pltpu.MemorySpace.VMEM),
    )(*flat_inputs)

    return out_padded[:B, :OUT]


def init_mlp_params(key, input_size, hidden_sizes, output_size):
    """Deterministic param init mirroring the nn.Linear shapes of ComplexMLPModel."""
    params = []
    sizes = [input_size] + list(hidden_sizes) + [output_size]
    for i in range(len(sizes) - 1):
        fan_in, fan_out = sizes[i], sizes[i + 1]
        key, wk, bk = jax.random.split(key, 3)
        bound = 1.0 / jnp.sqrt(fan_in)
        # PyTorch Linear stores weight as (out, in); we store transposed (in, out).
        w = jax.random.uniform(wk, (fan_in, fan_out), jnp.float32, -bound, bound)
        b = jax.random.uniform(bk, (1, fan_out), jnp.float32, -bound, bound)
        params.append((w, b))
    return params


if __name__ == "__main__":
    # Small shapes consistent with the module.
    batch = 8
    input_size = 32
    hidden_sizes = [64, 48]
    output_size = 16

    key = jax.random.PRNGKey(0)
    key, xk = jax.random.split(key)
    x = jax.random.normal(xk, (batch, input_size), jnp.float32)

    params = init_mlp_params(key, input_size, hidden_sizes, output_size)

    fwd = jax.jit(complex_mlp_forward)
    out = fwd(x, params)
    out = jax.block_until_ready(out)

    # Pure-JAX reference check.
    ref = x
    for i, (w, b) in enumerate(params):
        ref = ref @ w + b
        if i < len(params) - 1:
            ref = jnp.maximum(ref, 0.0)
    assert out.shape == (batch, output_size)
    assert jnp.allclose(out, ref, atol=1e-5, rtol=1e-5)

    print("KERNEL_OK")
</pallas_src>

<mosaic_0001>
module attributes {stable_mosaic.version = 11 : i64} {
  func.func @_fused_mlp_kernel(%arg0: memref<8x128xf32, #tpu.memory_space<vmem>>, %arg1: memref<128x128xf32, #tpu.memory_space<vmem>>, %arg2: memref<1x128xf32, #tpu.memory_space<vmem>>, %arg3: memref<128x128xf32, #tpu.memory_space<vmem>>, %arg4: memref<1x128xf32, #tpu.memory_space<vmem>>, %arg5: memref<128x128xf32, #tpu.memory_space<vmem>>, %arg6: memref<1x128xf32, #tpu.memory_space<vmem>>, %arg7: memref<8x128xf32, #tpu.memory_space<vmem>>) attributes {dimension_semantics = [], scalar_prefetch = 0 : i64, scratch_operands = 0 : i64, tpu.core_type = #tpu.core_type<tc>} {
    %c0 = arith.constant 0 : index
    %c0_0 = arith.constant 0 : index
    %0 = vector.load %arg0[%c0, %c0_0] : memref<8x128xf32, #tpu.memory_space<vmem>>, vector<8x128xf32>
    %c0_1 = arith.constant 0 : index
    %c0_2 = arith.constant 0 : index
    %1 = vector.load %arg1[%c0_1, %c0_2] : memref<128x128xf32, #tpu.memory_space<vmem>>, vector<128x128xf32>
    %c0_3 = arith.constant 0 : index
    %c0_4 = arith.constant 0 : index
    %2 = vector.load %arg2[%c0_3, %c0_4] : memref<1x128xf32, #tpu.memory_space<vmem>>, vector<1x128xf32>
    %cst = arith.constant dense<0.000000e+00> : vector<8x128xf32>
    %3 = tpu.matmul %0, %1, %cst {dimension_numbers = #tpu.dot_dimension_numbers<[1], [0], [0], [1], [0, 0, 1, 1], [], []>} : vector<8x128xf32>, vector<128x128xf32>, vector<8x128xf32> -> vector<8x128xf32>
    %4 = vector.broadcast %2 : vector<1x128xf32> to vector<8x128xf32>
    %5 = arith.addf %3, %4 : vector<8x128xf32>
    %cst_5 = arith.constant 0.000000e+00 : f32
    %6 = vector.broadcast %cst_5 : f32 to vector<8x128xf32>
    %7 = arith.maximumf %5, %6 : vector<8x128xf32>
    %c0_6 = arith.constant 0 : index
    %c0_7 = arith.constant 0 : index
    %8 = vector.load %arg3[%c0_6, %c0_7] : memref<128x128xf32, #tpu.memory_space<vmem>>, vector<128x128xf32>
    %c0_8 = arith.constant 0 : index
    %c0_9 = arith.constant 0 : index
    %9 = vector.load %arg4[%c0_8, %c0_9] : memref<1x128xf32, #tpu.memory_space<vmem>>, vector<1x128xf32>
    %cst_10 = arith.constant dense<0.000000e+00> : vector<8x128xf32>
    %10 = tpu.matmul %7, %8, %cst_10 {dimension_numbers = #tpu.dot_dimension_numbers<[1], [0], [0], [1], [0, 0, 1, 1], [], []>} : vector<8x128xf32>, vector<128x128xf32>, vector<8x128xf32> -> vector<8x128xf32>
    %11 = vector.broadcast %9 : vector<1x128xf32> to vector<8x128xf32>
    %12 = arith.addf %10, %11 : vector<8x128xf32>
    %cst_11 = arith.constant 0.000000e+00 : f32
    %13 = vector.broadcast %cst_11 : f32 to vector<8x128xf32>
    %14 = arith.maximumf %12, %13 : vector<8x128xf32>
    %c0_12 = arith.constant 0 : index
    %c0_13 = arith.constant 0 : index
    %15 = vector.load %arg5[%c0_12, %c0_13] : memref<128x128xf32, #tpu.memory_space<vmem>>, vector<128x128xf32>
    %c0_14 = arith.constant 0 : index
    %c0_15 = arith.constant 0 : index
    %16 = vector.load %arg6[%c0_14, %c0_15] : memref<1x128xf32, #tpu.memory_space<vmem>>, vector<1x128xf32>
    %cst_16 = arith.constant dense<0.000000e+00> : vector<8x128xf32>
    %17 = tpu.matmul %14, %15, %cst_16 {dimension_numbers = #tpu.dot_dimension_numbers<[1], [0], [0], [1], [0, 0, 1, 1], [], []>} : vector<8x128xf32>, vector<128x128xf32>, vector<8x128xf32> -> vector<8x128xf32>
    %18 = vector.broadcast %16 : vector<1x128xf32> to vector<8x128xf32>
    %19 = arith.addf %17, %18 : vector<8x128xf32>
    %c0_17 = arith.constant 0 : index
    %c0_18 = arith.constant 0 : index
    %20 = vector.load %arg7[%c0_17, %c0_18] : memref<8x128xf32, #tpu.memory_space<vmem>>, vector<8x128xf32>
    tpu.vector_store %arg7[%c0_17, %c0_18], %19 {strides = array<i32>} : memref<8x128xf32, #tpu.memory_space<vmem>>, vector<8x128xf32>,
    return
  }
}

</mosaic_0001>

<llo_original>
// kernel: complex_mlp_forward.1
$region0: #{complex_mlp_forward.1}
  #allocation0 [shape = 'u32[]', space=smem, size = 0x4, offset = 0x4, fixed_abs, tag = 'smem constant byte address 0x4 - core index']
  #allocation1 [shape = 'u32[144,128]{1,0:T(1,128)}', space=vmem, size = 0x12000, scoped, tag = 'internal scratch']
  %s0 = inlined_call_operand.vmem [shape: f32[8,128], index: 0, kind: input, shape index: {}]
  %s1 = inlined_call_operand.vmem [shape: f32[128,128], index: 1, kind: input, shape index: {}]
  %s2 = inlined_call_operand.vmem [shape: f32[1,128], index: 2, kind: input, shape index: {}]
  %s3 = inlined_call_operand.vmem [shape: f32[128,128], index: 3, kind: input, shape index: {}]
  %s4 = inlined_call_operand.vmem [shape: f32[1,128], index: 4, kind: input, shape index: {}]
  %s5 = inlined_call_operand.vmem [shape: f32[128,128], index: 5, kind: input, shape index: {}]
  %s6 = inlined_call_operand.vmem [shape: f32[1,128], index: 6, kind: input, shape index: {}]
  %s7 = inlined_call_operand.hbm [shape: f32[8,128], index: 7, kind: output, shape index: {}]
  %s8 = sld [smem:[#allocation0]]
  $region38: #{complex_mlp_forward.1} parent=0
    _
  %s10 = ssub.s32 1, %s8
  %s11 = scalar_select 0, %s10, %s8
  $region1: #{complex_mlp_forward.1} parent=0
    #allocation2 [shape = 'u8[4096]{0}', space=vmem, size = 0x1000, scoped, tag = 'output window, operand 0, single buffered']
    #allocation3 [shape = 's32[1]{0}', space=sflag, size = 0x4, scoped, tag = 'scoped memory for complex_mlp_forward.1']
    %12 = vsyncpa [#allocation3], 0
    // Predicated region
    $region2: #{complex_mlp_forward.1} parent=1 // pred_check
      _
    $region3: #{complex_mlp_forward.1} parent=1 // pred_check_branch
      %14 = sbr.rel (0) target = $region5
    $region4: #{complex_mlp_forward.1} parent=1 // pred_region
      _
    $region5: #{complex_mlp_forward.1} parent=1 // pred_fallthru
      _
    // Predicated region
    $region6: #{complex_mlp_forward.1} parent=1 // pred_check
      _
    $region7: #{complex_mlp_forward.1} parent=1 // pred_check_branch
      %16 = sbr.rel (0) target = $region9
    $region8: #{complex_mlp_forward.1} parent=1 // pred_region
      _
    $region9: #{complex_mlp_forward.1} parent=1 // pred_fallthru
      _
    // Predicated region
    $region10: #{complex_mlp_forward.1} parent=1 // pred_check
      _
    $region11: #{complex_mlp_forward.1} parent=1 // pred_check_branch
      %18 = sbr.rel (0) target = $region13
    $region12: #{complex_mlp_forward.1} parent=1 // pred_region
      _
    $region13: #{complex_mlp_forward.1} parent=1 // pred_fallthru
      _
    // Predicated region
    $region14: #{complex_mlp_forward.1} parent=1 // pred_check
      _
    $region15: #{complex_mlp_forward.1} parent=1 // pred_check_branch
      %20 = sbr.rel (0) target = $region17
    $region16: #{complex_mlp_forward.1} parent=1 // pred_region
      _
    $region17: #{complex_mlp_forward.1} parent=1 // pred_fallthru
      _
    // Predicated region
    $region18: #{complex_mlp_forward.1} parent=1 // pred_check
      _
    $region19: #{complex_mlp_forward.1} parent=1 // pred_check_branch
      %22 = sbr.rel (0) target = $region21
    $region20: #{complex_mlp_forward.1} parent=1 // pred_region
      _
    $region21: #{complex_mlp_forward.1} parent=1 // pred_fallthru
      _
    // Predicated region
    $region22: #{complex_mlp_forward.1} parent=1 // pred_check
      _
    $region23: #{complex_mlp_forward.1} parent=1 // pred_check_branch
      %24 = sbr.rel (0) target = $region25
    $region24: #{complex_mlp_forward.1} parent=1 // pred_region
      _
    $region25: #{complex_mlp_forward.1} parent=1 // pred_fallthru
      _
    // Predicated region
    $region26: #{complex_mlp_forward.1} parent=1 // pred_check
      _
    $region27: #{complex_mlp_forward.1} parent=1 // pred_check_branch
      %26 = sbr.rel (0) target = $region29
    $region28: #{complex_mlp_forward.1} parent=1 // pred_region
      _
    $region29: #{complex_mlp_forward.1} parent=1 // pred_fallthru
      _
    %v27 = vld [vmem:[%s0] sm:$0xff]
    %v28 = vld [vmem:[%s1] sm:$0xff]
    %v29 = vld [vmem:[%s1 + $0x8] sm:$0xff]
    %v30 = vld [vmem:[%s1 + $0x10] sm:$0xff]
    %v31 = vld [vmem:[%s1 + $0x18] sm:$0xff]
    %v32 = vld [vmem:[%s1 + $0x20] sm:$0xff]
    %v33 = vld [vmem:[%s1 + $0x28] sm:$0xff]
    %v34 = vld [vmem:[%s1 + $0x30] sm:$0xff]
    %v35 = vld [vmem:[%s1 + $0x38] sm:$0xff]
    %v36 = vld [vmem:[%s1 + $0x40] sm:$0xff]
    %v37 = vld [vmem:[%s1 + $0x48] sm:$0xff]
    %v38 = vld [vmem:[%s1 + $0x50] sm:$0xff]
    %v39 = vld [vmem:[%s1 + $0x58] sm:$0xff]
    %v40 = vld [vmem:[%s1 + $0x60] sm:$0xff]
    %v41 = vld [vmem:[%s1 + $0x68] sm:$0xff]
    %v42 = vld [vmem:[%s1 + $0x70] sm:$0xff]
    %v43 = vld [vmem:[%s1 + $0x78] sm:$0xff]
    %v44 = vld [vmem:[%s2] sm:$0x1]
    %v46 = vlaneseq
    %v47 = vshrl.u32 %v46, 7
    %v48 = vsub.s32 0, %v47
    %v49 = vrot.slane %v44, %v48
    %51 = vmatprep.subr.mxu0 0.0
    %52 = vmatpush1.msra.mxu0 %v28
    %53 = vmatprep.subr.mxu0 0.0
    %54 = vmatpush1.msra.mxu0 %v29
    %55 = vmatprep.subr.mxu0 0.0
    %56 = vmatpush1.msra.mxu0 %v30
    %57 = vmatprep.subr.mxu0 0.0
    %58 = vmatpush1.msra.mxu0 %v31
    %59 = vmatprep.subr.mxu0 0.0
    %60 = vmatpush1.msra.mxu0 %v32
    %61 = vmatprep.subr.mxu0 0.0
    %62 = vmatpush1.msra.mxu0 %v33
    %63 = vmatprep.subr.mxu0 0.0
    %64 = vmatpush1.msra.mxu0 %v34
    %65 = vmatprep.subr.mxu0 0.0
    %66 = vmatpush1.msra.mxu0 %v35
    %67 = vmatprep.subr.mxu0 0.0
    %68 = vmatpush1.msra.mxu0 %v36
    %69 = vmatprep.subr.mxu0 0.0
    %70 = vmatpush1.msra.mxu0 %v37
    %71 = vmatprep.subr.mxu0 0.0
    %72 = vmatpush1.msra.mxu0 %v38
    %73 = vmatprep.subr.mxu0 0.0
    %74 = vmatpush1.msra.mxu0 %v39
    %75 = vmatprep.subr.mxu0 0.0
    %76 = vmatpush1.msra.mxu0 %v40
    %77 = vmatprep.subr.mxu0 0.0
    %78 = vmatpush1.msra.mxu0 %v41
    %79 = vmatprep.subr.mxu0 0.0
    %80 = vmatpush1.msra.mxu0 %v42
    %81 = vmatprep.subr.mxu0 0.0
    %82 = vmatpush1.msra.mxu0 %v43
    %83 = vmatprep.subr.mxu0 0.0
    %84 = vmatpush1.msra.mxu0 0.0
    %85 = vmatprep.subr.mxu0 0.0
    %86 = vmatpush1.msra.mxu0 0.0
    %87 = vmatprep.subr.mxu0 0.0
    %88 = vmatpush1.msra.mxu0 0.0
    %89 = vmatprep.subr.mxu0 0.0
    %90 = vmatpush1.msra.mxu0 0.0
    %91 = vmatprep.subr.mxu0 0.0
    %92 = vmatpush1.msra.mxu0 0.0
    %93 = vmatprep.subr.mxu0 0.0
    %94 = vmatpush1.msra.mxu0 0.0
    %95 = vmatprep.subr.mxu0 0.0
    %96 = vmatpush1.msra.mxu0 0.0
    %97 = vmatprep.subr.mxu0 0.0
    %98 = vmatpush1.msra.mxu0 0.0
    %99 = vmatprep.subr.mxu0 0.0
    %100 = vmatpush1.msra.mxu0 0.0
    %101 = vmatprep.subr.mxu0 0.0
    %102 = vmatpush1.msra.mxu0 0.0
    %103 = vmatprep.subr.mxu0 0.0
    %104 = vmatpush1.msra.mxu0 0.0
    %105 = vmatprep.subr.mxu0 0.0
    %106 = vmatpush1.msra.mxu0 0.0
    %107 = vmatprep.subr.mxu0 0.0
    %108 = vmatpush1.msra.mxu0 0.0
    %109 = vmatprep.subr.mxu0 0.0
    %110 = vmatpush1.msra.mxu0 0.0
    %111 = vmatprep.subr.mxu0 0.0
    %112 = vmatpush1.msra.mxu0 0.0
    %113 = vmatprep.subr.mxu0 0.0
    %114 = vmatpush1.msra.mxu0 0.0
    %115 = vmatprep.mubr.f32.mxu0 0.0
    %116 = vmatmul.mubr.f32.gmra.mrb[0].mxu0 %v27
    %v117 = vpop.f32.mrb[0].mxu0
    %v118 = vadd.f32 %v49, %v117
    %v119 = vpop.f32.mrb[0].mxu0
    %120 = vdwg.mxu0
    %v121 = vmax.f32 %v118, 0.0
    %v122 = vld [vmem:[%s3] sm:$0xff]
    %v123 = vld [vmem:[%s3 + $0x8] sm:$0xff]
    %v124 = vld [vmem:[%s3 + $0x10] sm:$0xff]
    %v125 = vld [vmem:[%s3 + $0x18] sm:$0xff]
    %v126 = vld [vmem:[%s3 + $0x20] sm:$0xff]
    %v127 = vld [vmem:[%s3 + $0x28] sm:$0xff]
    %v128 = vld [vmem:[%s3 + $0x30] sm:$0xff]
    %v129 = vld [vmem:[%s3 + $0x38] sm:$0xff]
    %v130 = vld [vmem:[%s3 + $0x40] sm:$0xff]
    %v131 = vld [vmem:[%s3 + $0x48] sm:$0xff]
    %v132 = vld [vmem:[%s3 + $0x50] sm:$0xff]
    %v133 = vld [vmem:[%s3 + $0x58] sm:$0xff]
    %v134 = vld [vmem:[%s3 + $0x60] sm:$0xff]
    %v135 = vld [vmem:[%s3 + $0x68] sm:$0xff]
    %v136 = vld [vmem:[%s3 + $0x70] sm:$0xff]
    %v137 = vld [vmem:[%s3 + $0x78] sm:$0xff]
    %v138 = vld [vmem:[%s4] sm:$0x1]
    %v140 = vlaneseq
    %v141 = vshrl.u32 %v140, 7
    %v142 = vsub.s32 0, %v141
    %v143 = vrot.slane %v138, %v142
    %145 = vmatprep.subr.mxu0 0.0
    %146 = vmatpush1.msra.mxu0 %v122
    %147 = vmatprep.subr.mxu0 0.0
    %148 = vmatpush1.msra.mxu0 %v123
    %149 = vmatprep.subr.mxu0 0.0
    %150 = vmatpush1.msra.mxu0 %v124
    %151 = vmatprep.subr.mxu0 0.0
    %152 = vmatpush1.msra.mxu0 %v125
    %153 = vmatprep.subr.mxu0 0.0
    %154 = vmatpush1.msra.mxu0 %v126
    %155 = vmatprep.subr.mxu0 0.0
    %156 = vmatpush1.msra.mxu0 %v127
    %157 = vmatprep.subr.mxu0 0.0
    %158 = vmatpush1.msra.mxu0 %v128
    %159 = vmatprep.subr.mxu0 0.0
    %160 = vmatpush1.msra.mxu0 %v129
    %161 = vmatprep.subr.mxu0 0.0
    %162 = vmatpush1.msra.mxu0 %v130
    %163 = vmatprep.subr.mxu0 0.0
    %164 = vmatpush1.msra.mxu0 %v131
    %165 = vmatprep.subr.mxu0 0.0
    %166 = vmatpush1.msra.mxu0 %v132
    %167 = vmatprep.subr.mxu0 0.0
    %168 = vmatpush1.msra.mxu0 %v133
    %169 = vmatprep.subr.mxu0 0.0
    %170 = vmatpush1.msra.mxu0 %v134
    %171 = vmatprep.subr.mxu0 0.0
    %172 = vmatpush1.msra.mxu0 %v135
    %173 = vmatprep.subr.mxu0 0.0
    %174 = vmatpush1.msra.mxu0 %v136
    %175 = vmatprep.subr.mxu0 0.0
    %176 = vmatpush1.msra.mxu0 %v137
    %177 = vmatprep.subr.mxu0 0.0
    %178 = vmatpush1.msra.mxu0 0.0
    %179 = vmatprep.subr.mxu0 0.0
    %180 = vmatpush1.msra.mxu0 0.0
    %181 = vmatprep.subr.mxu0 0.0
    %182 = vmatpush1.msra.mxu0 0.0
    %183 = vmatprep.subr.mxu0 0.0
    %184 = vmatpush1.msra.mxu0 0.0
    %185 = vmatprep.subr.mxu0 0.0
    %186 = vmatpush1.msra.mxu0 0.0
    %187 = vmatprep.subr.mxu0 0.0
    %188 = vmatpush1.msra.mxu0 0.0
    %189 = vmatprep.subr.mxu0 0.0
    %190 = vmatpush1.msra.mxu0 0.0
    %191 = vmatprep.subr.mxu0 0.0
    %192 = vmatpush1.msra.mxu0 0.0
    %193 = vmatprep.subr.mxu0 0.0
    %194 = vmatpush1.msra.mxu0 0.0
    %195 = vmatprep.subr.mxu0 0.0
    %196 = vmatpush1.msra.mxu0 0.0
    %197 = vmatprep.subr.mxu0 0.0
    %198 = vmatpush1.msra.mxu0 0.0
    %199 = vmatprep.subr.mxu0 0.0
    %200 = vmatpush1.msra.mxu0 0.0
    %201 = vmatprep.subr.mxu0 0.0
    %202 = vmatpush1.msra.mxu0 0.0
    %203 = vmatprep.subr.mxu0 0.0
    %204 = vmatpush1.msra.mxu0 0.0
    %205 = vmatprep.subr.mxu0 0.0
    %206 = vmatpush1.msra.mxu0 0.0
    %207 = vmatprep.subr.mxu0 0.0
    %208 = vmatpush1.msra.mxu0 0.0
    %209 = vmatprep.mubr.f32.mxu0 0.0
    %210 = vmatmul.mubr.f32.gmra.mrb[0].mxu0 %v121
    %v211 = vpop.f32.mrb[0].mxu0
    %v212 = vadd.f32 %v143, %v211
    %v213 = vpop.f32.mrb[0].mxu0
    %214 = vdwg.mxu0
    %v215 = vmax.f32 %v212, 0.0
    %v216 = vld [vmem:[%s5] sm:$0xff]
    %v217 = vld [vmem:[%s5 + $0x8] sm:$0xff]
    %v218 = vld [vmem:[%s5 + $0x10] sm:$0xff]
    %v219 = vld [vmem:[%s5 + $0x18] sm:$0xff]
    %v220 = vld [vmem:[%s5 + $0x20] sm:$0xff]
    %v221 = vld [vmem:[%s5 + $0x28] sm:$0xff]
    %v222 = vld [vmem:[%s5 + $0x30] sm:$0xff]
    %v223 = vld [vmem:[%s5 + $0x38] sm:$0xff]
    %v224 = vld [vmem:[%s5 + $0x40] sm:$0xff]
    %v225 = vld [vmem:[%s5 + $0x48] sm:$0xff]
    %v226 = vld [vmem:[%s5 + $0x50] sm:$0xff]
    %v227 = vld [vmem:[%s5 + $0x58] sm:$0xff]
    %v228 = vld [vmem:[%s5 + $0x60] sm:$0xff]
    %v229 = vld [vmem:[%s5 + $0x68] sm:$0xff]
    %v230 = vld [vmem:[%s5 + $0x70] sm:$0xff]
    %v231 = vld [vmem:[%s5 + $0x78] sm:$0xff]
    %v232 = vld [vmem:[%s6] sm:$0x1]
    %v234 = vlaneseq
    %v235 = vshrl.u32 %v234, 7
    %v236 = vsub.s32 0, %v235
    %v237 = vrot.slane %v232, %v236
    %239 = vmatprep.subr.mxu0 0.0
    %240 = vmatpush1.msra.mxu0 %v216
    %241 = vmatprep.subr.mxu0 0.0
    %242 = vmatpush1.msra.mxu0 %v217
    %243 = vmatprep.subr.mxu0 0.0
    %244 = vmatpush1.msra.mxu0 %v218
    %245 = vmatprep.subr.mxu0 0.0
    %246 = vmatpush1.msra.mxu0 %v219
    %247 = vmatprep.subr.mxu0 0.0
    %248 = vmatpush1.msra.mxu0 %v220
    %249 = vmatprep.subr.mxu0 0.0
    %250 = vmatpush1.msra.mxu0 %v221
    %251 = vmatprep.subr.mxu0 0.0
    %252 = vmatpush1.msra.mxu0 %v222
    %253 = vmatprep.subr.mxu0 0.0
    %254 = vmatpush1.msra.mxu0 %v223
    %255 = vmatprep.subr.mxu0 0.0
    %256 = vmatpush1.msra.mxu0 %v224
    %257 = vmatprep.subr.mxu0 0.0
    %258 = vmatpush1.msra.mxu0 %v225
    %259 = vmatprep.subr.mxu0 0.0
    %260 = vmatpush1.msra.mxu0 %v226
    %261 = vmatprep.subr.mxu0 0.0
    %262 = vmatpush1.msra.mxu0 %v227
    %263 = vmatprep.subr.mxu0 0.0
    %264 = vmatpush1.msra.mxu0 %v228
    %265 = vmatprep.subr.mxu0 0.0
    %266 = vmatpush1.msra.mxu0 %v229
    %267 = vmatprep.subr.mxu0 0.0
    %268 = vmatpush1.msra.mxu0 %v230
    %269 = vmatprep.subr.mxu0 0.0
    %270 = vmatpush1.msra.mxu0 %v231
    %271 = vmatprep.subr.mxu0 0.0
    %272 = vmatpush1.msra.mxu0 0.0
    %273 = vmatprep.subr.mxu0 0.0
    %274 = vmatpush1.msra.mxu0 0.0
    %275 = vmatprep.subr.mxu0 0.0
    %276 = vmatpush1.msra.mxu0 0.0
    %277 = vmatprep.subr.mxu0 0.0
    %278 = vmatpush1.msra.mxu0 0.0
    %279 = vmatprep.subr.mxu0 0.0
    %280 = vmatpush1.msra.mxu0 0.0
    %281 = vmatprep.subr.mxu0 0.0
    %282 = vmatpush1.msra.mxu0 0.0
    %283 = vmatprep.subr.mxu0 0.0
    %284 = vmatpush1.msra.mxu0 0.0
    %285 = vmatprep.subr.mxu0 0.0
    %286 = vmatpush1.msra.mxu0 0.0
    %287 = vmatprep.subr.mxu0 0.0
    %288 = vmatpush1.msra.mxu0 0.0
    %289 = vmatprep.subr.mxu0 0.0
    %290 = vmatpush1.msra.mxu0 0.0
    %291 = vmatprep.subr.mxu0 0.0
    %292 = vmatpush1.msra.mxu0 0.0
    %293 = vmatprep.subr.mxu0 0.0
    %294 = vmatpush1.msra.mxu0 0.0
    %295 = vmatprep.subr.mxu0 0.0
    %296 = vmatpush1.msra.mxu0 0.0
    %297 = vmatprep.subr.mxu0 0.0
    %298 = vmatpush1.msra.mxu0 0.0
    %299 = vmatprep.subr.mxu0 0.0
    %300 = vmatpush1.msra.mxu0 0.0
    %301 = vmatprep.subr.mxu0 0.0
    %302 = vmatpush1.msra.mxu0 0.0
    %303 = vmatprep.mubr.f32.mxu0 0.0
    %304 = vmatmul.mubr.f32.gmra.mrb[0].mxu0 %v215
    %v305 = vpop.f32.mrb[0].mxu0
    %v306 = vadd.f32 %v237, %v305
    %v307 = vpop.f32.mrb[0].mxu0
    %308 = vdwg.mxu0
    %309 = vst [vmem:[#allocation2] sm:$0xff] %v306
    // Predicated region
    $region30: #{complex_mlp_forward.1} parent=1 // pred_check
      _
    $region31: #{complex_mlp_forward.1} parent=1 // pred_check_branch
      %311 = sbr.rel (0) target = $region33
    $region32: #{complex_mlp_forward.1} parent=1 // pred_region
      %s313 = ssub.s32 128, 128
      %314 = vsyncadd [#allocation3], %s313
      %s316 = sshll.u32 [#allocation2], 4
      %s317 = int_to_ptr.vmem [resolvable:$true] %s316
      %319 = dma.vmem_to_hbm [thread:$0]  %s317, 128, %s7, [#allocation3]
    $region33: #{complex_mlp_forward.1} parent=1 // pred_fallthru
      _
    // Predicated region
    $region34: #{complex_mlp_forward.1} parent=1 // pred_check
      _
    $region35: #{complex_mlp_forward.1} parent=1 // pred_check_branch
      %321 = sbr.rel (0) target = $region37
    $region36: #{complex_mlp_forward.1} parent=1 // pred_region
      %322 = dma.done [#allocation3], 128
    $region37: #{complex_mlp_forward.1} parent=1 // pred_fallthru
      _
    %323 = vsyncpa [#allocation3], 1

</llo_original>
